<compile_context>
chip_gen: v7x
topology: tpu7x:2x2x1
jax: 0.10.0
libtpu: 0.0.40
codegen_flags: <defaults>
</compile_context>

<pallas_src>
import numpy as np
import jax
import jax.numpy as jnp
from jax.experimental import pallas as pl
from jax.experimental.pallas import tpu as pltpu

WEIGHT_REG = 1e-6
DROPOUT_REG = 1e-5
EPS = 1e-7
TEMP = 0.1
INV_TEMP = 1.0 / TEMP  # == 10.0 in f32


# --------------------------------- kernel -----------------------------------
def net_kernel(s_ref,                                    # SMEM scalars (10,)
               x_ref, nl2_ref, nl3_ref, nlmu_ref, nllv_ref,
               w1_ref, b1_ref, w2_ref, b2_ref, w3_ref, b3_ref,
               wh_ref,                                    # (2, H3) head weights
               out_ref):                                  # (TB, 2) [mean, logvar]
    f32 = jnp.float32

    def cdrop(h, noise_logit, p_log_ratio, inv_retain):
        # drop_prob = sigmoid((log(p/(1-p)) + log(n/(1-n))) / TEMP)
        drop_prob = jax.nn.sigmoid((p_log_ratio + noise_logit) * INV_TEMP)
        return h * (1.0 - drop_prob) * inv_retain

    x = x_ref[...]

    # x1 = tanh(linear1(x))  (no dropout on the first layer, as in the module)
    x1 = jnp.tanh(jnp.dot(x, w1_ref[...], preferred_element_type=f32) + b1_ref[...])

    # conc_drop2( x1, Sequential(linear2, tanh) )
    x1d = cdrop(x1, nl2_ref[...], s_ref[0], s_ref[1])
    x2 = jnp.tanh(jnp.dot(x1d, w2_ref[...], preferred_element_type=f32) + b2_ref[...])

    # conc_drop3( x2, Sequential(linear3, tanh) )
    x2d = cdrop(x2, nl3_ref[...], s_ref[2], s_ref[3])
    x3 = jnp.tanh(jnp.dot(x2d, w3_ref[...], preferred_element_type=f32) + b3_ref[...])

    # conc_drop_mu( x3, out_mu )  -- 1-wide head on VPU/XLU, not MXU
    x3d_mu = cdrop(x3, nlmu_ref[...], s_ref[4], s_ref[5])
    mean = jnp.sum(x3d_mu * wh_ref[0:1, :], axis=-1, keepdims=True) + s_ref[8]

    # conc_drop_logvar( x3, out_logvar )
    x3d_lv = cdrop(x3, nllv_ref[...], s_ref[6], s_ref[7])
    logv = jnp.sum(x3d_lv * wh_ref[1:2, :], axis=-1, keepdims=True) + s_ref[9]

    out_ref[...] = jnp.concatenate([mean, logv], axis=-1)


# --------------------------------- wrapper ----------------------------------
def net_forward(p_logits, x, noise2, noise3, noise_mu, noise_lv, params, tb=None):
    (w1, b1, w2, b2, w3, b3, wmu, bmu, wlv, blv) = params
    f32 = jnp.float32
    B, F = x.shape
    H1, H2, H3 = w1.shape[1], w2.shape[1], w3.shape[1]

    if tb is None:
        tb = min(B, 256)
    assert B % tb == 0 and tb % 8 == 0, "batch tile must divide B and be a multiple of 8"
    nb = B // tb

    # ---- hoisted scalar math on p (sigmoid/log/reciprocal done once) ----
    p = jax.nn.sigmoid(p_logits.astype(f32))                       # (4,)
    p_log_ratio = jnp.log(p + EPS) - jnp.log(1.0 - p + EPS)        # (4,)
    inv_retain = 1.0 / (1.0 - p)                                   # (4,)

    scalars = jnp.stack([
        p_log_ratio[0], inv_retain[0],
        p_log_ratio[1], inv_retain[1],
        p_log_ratio[2], inv_retain[2],
        p_log_ratio[3], inv_retain[3],
        bmu[0, 0], blv[0, 0],
    ]).astype(f32)                                                 # (10,) -> SMEM

    # ---- pre-fold the noise into its logit (halves in-kernel EUP logs) ----
    def nlogit(n):
        return (jnp.log(n + EPS) - jnp.log(1.0 - n + EPS)).astype(f32)

    nl2, nl3, nlmu, nllv = map(nlogit, (noise2, noise3, noise_mu, noise_lv))

    # fused head weights: row 0 = mu, row 1 = logvar
    w_heads = jnp.concatenate([wmu.T, wlv.T], axis=0).astype(f32)  # (2, H3)

    # ---- regularization: depends only on p and weights -> computed here ----
    def cd_reg(p_i, w, b, input_dim):
        ss = jnp.sum(w ** 2) + jnp.sum(b ** 2)
        weights_reg = WEIGHT_REG * ss / (1.0 - p_i)
        dropout_reg = (p_i * jnp.log(p_i) + (1.0 - p_i) * jnp.log(1.0 - p_i))
        dropout_reg = dropout_reg * (DROPOUT_REG * float(input_dim))
        return weights_reg + dropout_reg

    reg = (cd_reg(p[0], w2, b2, H1) + cd_reg(p[1], w3, b3, H2)
           + cd_reg(p[2], wmu, bmu, H3) + cd_reg(p[3], wlv, blv, H3))

    # ---- batch-tiled pallas call (weights resident across grid steps) ----
    grid_spec = pltpu.PrefetchScalarGridSpec(
        num_scalar_prefetch=1,
        grid=(nb,),
        in_specs=[
            pl.BlockSpec((tb, F), lambda i, s: (i, 0)),    # x
            pl.BlockSpec((tb, H1), lambda i, s: (i, 0)),   # noise logit 2
            pl.BlockSpec((tb, H2), lambda i, s: (i, 0)),   # noise logit 3
            pl.BlockSpec((tb, H3), lambda i, s: (i, 0)),   # noise logit mu
            pl.BlockSpec((tb, H3), lambda i, s: (i, 0)),   # noise logit logvar
            pl.BlockSpec((F, H1), lambda i, s: (0, 0)),    # w1
            pl.BlockSpec((1, H1), lambda i, s: (0, 0)),    # b1
            pl.BlockSpec((H1, H2), lambda i, s: (0, 0)),   # w2
            pl.BlockSpec((1, H2), lambda i, s: (0, 0)),    # b2
            pl.BlockSpec((H2, H3), lambda i, s: (0, 0)),   # w3
            pl.BlockSpec((1, H3), lambda i, s: (0, 0)),    # b3
            pl.BlockSpec((2, H3), lambda i, s: (0, 0)),    # fused head weights
        ],
        out_specs=pl.BlockSpec((tb, 2), lambda i, s: (i, 0)),
    )

    out = pl.pallas_call(
        net_kernel,
        out_shape=jax.ShapeDtypeStruct((B, 2), f32),
        grid_spec=grid_spec,
        compiler_params=pltpu.CompilerParams(
            dimension_semantics=("parallel",)),
    )(scalars, x, nl2, nl3, nlmu, nllv,
      w1, b1, w2, b2, w3, b3, w_heads)

    mean = out[:, 0:1]
    log_var = out[:, 1:2]
    return mean, log_var, reg


# ---------------- pure-JAX reference (mirrors the PyTorch code) -------------
def _concrete_dropout_ref(h, noise, p):
    drop_logit = (jnp.log(p + EPS) - jnp.log(1.0 - p + EPS)
                  + jnp.log(noise + EPS) - jnp.log(1.0 - noise + EPS))
    drop_prob = jax.nn.sigmoid(drop_logit / TEMP)
    return h * (1.0 - drop_prob) / (1.0 - p)


def reference_forward(p_logits, x, noise2, noise3, noise_mu, noise_lv, params):
    (w1, b1, w2, b2, w3, b3, wmu, bmu, wlv, blv) = params

    def stage(h, noise, p_logit, w, b, actv):
        p = jax.nn.sigmoid(p_logit)
        hd = _concrete_dropout_ref(h, noise, p)
        out = hd @ w + b
        if actv:
            out = jnp.tanh(out)
        ss = jnp.sum(w ** 2) + jnp.sum(b ** 2)
        weights_reg = WEIGHT_REG * ss / (1.0 - p)
        dropout_reg = (p * jnp.log(p) + (1.0 - p) * jnp.log(1.0 - p))
        dropout_reg = dropout_reg * (DROPOUT_REG * float(h.shape[1]))
        return out, weights_reg + dropout_reg

    x1 = jnp.tanh(x @ w1 + b1)
    x2, r0 = stage(x1, noise2, p_logits[0], w2, b2, True)
    x3, r1 = stage(x2, noise3, p_logits[1], w3, b3, True)
    mean, r2 = stage(x3, noise_mu, p_logits[2], wmu, bmu, False)
    logv, r3 = stage(x3, noise_lv, p_logits[3], wlv, blv, False)
    return mean, logv, r0 + r1 + r2 + r3


def _linear_init(key, fan_in, fan_out):
    kw, kb = jax.random.split(key)
    bound = 1.0 / np.sqrt(fan_in)
    w = jax.random.uniform(kw, (fan_in, fan_out), jnp.float32, -bound, bound)
    b = jax.random.uniform(kb, (1, fan_out), jnp.float32, -bound, bound)
    return w, b


if __name__ == "__main__":
    key = jax.random.PRNGKey(0)
    B, n_inputs = 64, 16
    n_units = [32, 32, 32]
    TB = 16   # batch tile -> grid of 4, exercises "parallel" semantics

    keys = jax.random.split(key, 10)
    w1, b1 = _linear_init(keys[0], n_inputs, n_units[0])
    w2, b2 = _linear_init(keys[1], n_units[0], n_units[1])
    w3, b3 = _linear_init(keys[2], n_units[1], n_units[2])
    wmu, bmu = _linear_init(keys[3], n_units[2], 1)
    wlv, blv = _linear_init(keys[4], n_units[2], 1)
    params = (w1, b1, w2, b2, w3, b3, wmu, bmu, wlv, blv)

    # p_logit init: uniform(logit(0.1), logit(0.1)) -> deterministic constant.
    p_init = float(np.log(0.1) - np.log(1.0 - 0.1))
    p_logits = jnp.full((4,), p_init, jnp.float32)

    x = jax.random.normal(keys[5], (B, n_inputs), jnp.float32)
    noise2 = jax.random.uniform(keys[6], (B, n_units[0]), jnp.float32)
    noise3 = jax.random.uniform(keys[7], (B, n_units[1]), jnp.float32)
    noise_mu = jax.random.uniform(keys[8], (B, n_units[2]), jnp.float32)
    noise_lv = jax.random.uniform(keys[9], (B, n_units[2]), jnp.float32)

    mean, log_var, reg = net_forward(p_logits, x, noise2, noise3,
                                     noise_mu, noise_lv, params, tb=TB)
    jax.block_until_ready((mean, log_var, reg))

    # Correctness check against the pure-JAX mirror of the PyTorch math.
    m_ref, lv_ref, r_ref = reference_forward(p_logits, x, noise2, noise3,
                                             noise_mu, noise_lv, params)
    np.testing.assert_allclose(np.asarray(mean), np.asarray(m_ref),
                               rtol=1e-5, atol=1e-5)
    np.testing.assert_allclose(np.asarray(log_var), np.asarray(lv_ref),
                               rtol=1e-5, atol=1e-5)
    np.testing.assert_allclose(float(reg), float(r_ref),
                               rtol=1e-5, atol=1e-6)

    print("KERNEL_OK")
</pallas_src>

<mosaic_0001>
module attributes {stable_mosaic.version = 11 : i64} {
  func.func @net_kernel(%arg0: i32, %arg1: memref<10xf32, #tpu.memory_space<smem>>, %arg2: memref<16x16xf32, #tpu.memory_space<vmem>>, %arg3: memref<16x32xf32, #tpu.memory_space<vmem>>, %arg4: memref<16x32xf32, #tpu.memory_space<vmem>>, %arg5: memref<16x32xf32, #tpu.memory_space<vmem>>, %arg6: memref<16x32xf32, #tpu.memory_space<vmem>>, %arg7: memref<16x32xf32, #tpu.memory_space<vmem>>, %arg8: memref<1x32xf32, #tpu.memory_space<vmem>>, %arg9: memref<32x32xf32, #tpu.memory_space<vmem>>, %arg10: memref<1x32xf32, #tpu.memory_space<vmem>>, %arg11: memref<32x32xf32, #tpu.memory_space<vmem>>, %arg12: memref<1x32xf32, #tpu.memory_space<vmem>>, %arg13: memref<2x32xf32, #tpu.memory_space<vmem>>, %arg14: memref<16x2xf32, #tpu.memory_space<vmem>>) attributes {dimension_semantics = [#tpu.dimension_semantics<parallel>], iteration_bounds = array<i64: 4>, scalar_prefetch = 1 : i64, scratch_operands = 0 : i64, tpu.core_type = #tpu.core_type<tc>, window_params = [{transform_indices = @transform_0, window_bounds = array<i64: 16, 16>}, {transform_indices = @transform_1, window_bounds = array<i64: 16, 32>}, {transform_indices = @transform_2, window_bounds = array<i64: 16, 32>}, {transform_indices = @transform_3, window_bounds = array<i64: 16, 32>}, {transform_indices = @transform_4, window_bounds = array<i64: 16, 32>}, {pipeline_mode = #tpu.pipeline_mode<synchronous>, transform_indices = @transform_5, window_bounds = array<i64: 16, 32>}, {pipeline_mode = #tpu.pipeline_mode<synchronous>, transform_indices = @transform_6, window_bounds = array<i64: 1, 32>}, {pipeline_mode = #tpu.pipeline_mode<synchronous>, transform_indices = @transform_7, window_bounds = array<i64: 32, 32>}, {pipeline_mode = #tpu.pipeline_mode<synchronous>, transform_indices = @transform_8, window_bounds = array<i64: 1, 32>}, {pipeline_mode = #tpu.pipeline_mode<synchronous>, transform_indices = @transform_9, window_bounds = array<i64: 32, 32>}, {pipeline_mode = #tpu.pipeline_mode<synchronous>, transform_indices = @transform_10, window_bounds = array<i64: 1, 32>}, {pipeline_mode = #tpu.pipeline_mode<synchronous>, transform_indices = @transform_11, window_bounds = array<i64: 2, 32>}, {transform_indices = @transform_12, window_bounds = array<i64: 16, 2>}]} {
    %c0 = arith.constant 0 : index
    %c0_0 = arith.constant 0 : index
    %0 = vector.load %arg2[%c0, %c0_0] : memref<16x16xf32, #tpu.memory_space<vmem>>, vector<16x16xf32>
    %c0_1 = arith.constant 0 : index
    %c0_2 = arith.constant 0 : index
    %1 = vector.load %arg7[%c0_1, %c0_2] : memref<16x32xf32, #tpu.memory_space<vmem>>, vector<16x32xf32>
    %cst = arith.constant dense<0.000000e+00> : vector<16x32xf32>
    %2 = tpu.matmul %0, %1, %cst {dimension_numbers = #tpu.dot_dimension_numbers<[1], [0], [0], [1], [0, 0, 1, 1], [], []>} : vector<16x16xf32>, vector<16x32xf32>, vector<16x32xf32> -> vector<16x32xf32>
    %c0_3 = arith.constant 0 : index
    %c0_4 = arith.constant 0 : index
    %3 = vector.load %arg8[%c0_3, %c0_4] : memref<1x32xf32, #tpu.memory_space<vmem>>, vector<1x32xf32>
    %4 = vector.broadcast %3 : vector<1x32xf32> to vector<16x32xf32>
    %5 = arith.addf %2, %4 : vector<16x32xf32>
    %6 = math.tanh %5 : vector<16x32xf32>
    %c0_5 = arith.constant 0 : index
    %c0_6 = arith.constant 0 : index
    %7 = vector.load %arg3[%c0_5, %c0_6] : memref<16x32xf32, #tpu.memory_space<vmem>>, vector<16x32xf32>
    %c0_7 = arith.constant 0 : index
    %8 = memref.load %arg1[%c0_7] : memref<10xf32, #tpu.memory_space<smem>>
    %c1 = arith.constant 1 : index
    %9 = memref.load %arg1[%c1] : memref<10xf32, #tpu.memory_space<smem>>
    %10 = vector.broadcast %8 : f32 to vector<16x32xf32>
    %11 = arith.addf %10, %7 : vector<16x32xf32>
    %cst_8 = arith.constant 1.000000e+01 : f32
    %12 = vector.broadcast %cst_8 : f32 to vector<16x32xf32>
    %13 = arith.mulf %11, %12 : vector<16x32xf32>
    %14 = arith.negf %13 : vector<16x32xf32>
    %15 = math.exp %14 : vector<16x32xf32>
    %cst_9 = arith.constant 1.000000e+00 : f32
    %16 = vector.broadcast %cst_9 : f32 to vector<16x32xf32>
    %17 = arith.addf %16, %15 : vector<16x32xf32>
    %18 = arith.divf %16, %17 : vector<16x32xf32>
    %cst_10 = arith.constant 1.000000e+00 : f32
    %19 = vector.broadcast %cst_10 : f32 to vector<16x32xf32>
    %20 = arith.subf %19, %18 : vector<16x32xf32>
    %21 = arith.mulf %6, %20 : vector<16x32xf32>
    %22 = vector.broadcast %9 : f32 to vector<16x32xf32>
    %23 = arith.mulf %21, %22 : vector<16x32xf32>
    %c0_11 = arith.constant 0 : index
    %c0_12 = arith.constant 0 : index
    %24 = vector.load %arg9[%c0_11, %c0_12] : memref<32x32xf32, #tpu.memory_space<vmem>>, vector<32x32xf32>
    %cst_13 = arith.constant dense<0.000000e+00> : vector<16x32xf32>
    %25 = tpu.matmul %23, %24, %cst_13 {dimension_numbers = #tpu.dot_dimension_numbers<[1], [0], [0], [1], [0, 0, 1, 1], [], []>} : vector<16x32xf32>, vector<32x32xf32>, vector<16x32xf32> -> vector<16x32xf32>
    %c0_14 = arith.constant 0 : index
    %c0_15 = arith.constant 0 : index
    %26 = vector.load %arg10[%c0_14, %c0_15] : memref<1x32xf32, #tpu.memory_space<vmem>>, vector<1x32xf32>
    %27 = vector.broadcast %26 : vector<1x32xf32> to vector<16x32xf32>
    %28 = arith.addf %25, %27 : vector<16x32xf32>
    %29 = math.tanh %28 : vector<16x32xf32>
    %c0_16 = arith.constant 0 : index
    %c0_17 = arith.constant 0 : index
    %30 = vector.load %arg4[%c0_16, %c0_17] : memref<16x32xf32, #tpu.memory_space<vmem>>, vector<16x32xf32>
    %c2 = arith.constant 2 : index
    %31 = memref.load %arg1[%c2] : memref<10xf32, #tpu.memory_space<smem>>
    %c3 = arith.constant 3 : index
    %32 = memref.load %arg1[%c3] : memref<10xf32, #tpu.memory_space<smem>>
    %33 = vector.broadcast %31 : f32 to vector<16x32xf32>
    %34 = arith.addf %33, %30 : vector<16x32xf32>
    %cst_18 = arith.constant 1.000000e+01 : f32
    %35 = vector.broadcast %cst_18 : f32 to vector<16x32xf32>
    %36 = arith.mulf %34, %35 : vector<16x32xf32>
    %37 = arith.negf %36 : vector<16x32xf32>
    %38 = math.exp %37 : vector<16x32xf32>
    %cst_19 = arith.constant 1.000000e+00 : f32
    %39 = vector.broadcast %cst_19 : f32 to vector<16x32xf32>
    %40 = arith.addf %39, %38 : vector<16x32xf32>
    %41 = arith.divf %39, %40 : vector<16x32xf32>
    %cst_20 = arith.constant 1.000000e+00 : f32
    %42 = vector.broadcast %cst_20 : f32 to vector<16x32xf32>
    %43 = arith.subf %42, %41 : vector<16x32xf32>
    %44 = arith.mulf %29, %43 : vector<16x32xf32>
    %45 = vector.broadcast %32 : f32 to vector<16x32xf32>
    %46 = arith.mulf %44, %45 : vector<16x32xf32>
    %c0_21 = arith.constant 0 : index
    %c0_22 = arith.constant 0 : index
    %47 = vector.load %arg11[%c0_21, %c0_22] : memref<32x32xf32, #tpu.memory_space<vmem>>, vector<32x32xf32>
    %cst_23 = arith.constant dense<0.000000e+00> : vector<16x32xf32>
    %48 = tpu.matmul %46, %47, %cst_23 {dimension_numbers = #tpu.dot_dimension_numbers<[1], [0], [0], [1], [0, 0, 1, 1], [], []>} : vector<16x32xf32>, vector<32x32xf32>, vector<16x32xf32> -> vector<16x32xf32>
    %c0_24 = arith.constant 0 : index
    %c0_25 = arith.constant 0 : index
    %49 = vector.load %arg12[%c0_24, %c0_25] : memref<1x32xf32, #tpu.memory_space<vmem>>, vector<1x32xf32>
    %50 = vector.broadcast %49 : vector<1x32xf32> to vector<16x32xf32>
    %51 = arith.addf %48, %50 : vector<16x32xf32>
    %52 = math.tanh %51 : vector<16x32xf32>
    %c0_26 = arith.constant 0 : index
    %c0_27 = arith.constant 0 : index
    %53 = vector.load %arg5[%c0_26, %c0_27] : memref<16x32xf32, #tpu.memory_space<vmem>>, vector<16x32xf32>
    %c4 = arith.constant 4 : index
    %54 = memref.load %arg1[%c4] : memref<10xf32, #tpu.memory_space<smem>>
    %c5 = arith.constant 5 : index
    %55 = memref.load %arg1[%c5] : memref<10xf32, #tpu.memory_space<smem>>
    %56 = vector.broadcast %54 : f32 to vector<16x32xf32>
    %57 = arith.addf %56, %53 : vector<16x32xf32>
    %cst_28 = arith.constant 1.000000e+01 : f32
    %58 = vector.broadcast %cst_28 : f32 to vector<16x32xf32>
    %59 = arith.mulf %57, %58 : vector<16x32xf32>
    %60 = arith.negf %59 : vector<16x32xf32>
    %61 = math.exp %60 : vector<16x32xf32>
    %cst_29 = arith.constant 1.000000e+00 : f32
    %62 = vector.broadcast %cst_29 : f32 to vector<16x32xf32>
    %63 = arith.addf %62, %61 : vector<16x32xf32>
    %64 = arith.divf %62, %63 : vector<16x32xf32>
    %cst_30 = arith.constant 1.000000e+00 : f32
    %65 = vector.broadcast %cst_30 : f32 to vector<16x32xf32>
    %66 = arith.subf %65, %64 : vector<16x32xf32>
    %67 = arith.mulf %52, %66 : vector<16x32xf32>
    %68 = vector.broadcast %55 : f32 to vector<16x32xf32>
    %69 = arith.mulf %67, %68 : vector<16x32xf32>
    %c0_31 = arith.constant 0 : index
    %c0_32 = arith.constant 0 : index
    %70 = vector.load %arg13[%c0_31, %c0_32] : memref<2x32xf32, #tpu.memory_space<vmem>>, vector<1x32xf32>
    %71 = vector.broadcast %70 : vector<1x32xf32> to vector<16x32xf32>
    %72 = arith.mulf %69, %71 : vector<16x32xf32>
    %cst_33 = arith.constant dense<0.000000e+00> : vector<16xf32>
    %73 = vector.multi_reduction <add>, %72, %cst_33 [1] : vector<16x32xf32> to vector<16xf32>
    %74 = vector.shape_cast %73 : vector<16xf32> to vector<16x1xf32>
    %c8 = arith.constant 8 : index
    %75 = memref.load %arg1[%c8] : memref<10xf32, #tpu.memory_space<smem>>
    %76 = vector.broadcast %75 : f32 to vector<16x1xf32>
    %77 = arith.addf %74, %76 : vector<16x1xf32>
    %c0_34 = arith.constant 0 : index
    %c0_35 = arith.constant 0 : index
    %78 = vector.load %arg6[%c0_34, %c0_35] : memref<16x32xf32, #tpu.memory_space<vmem>>, vector<16x32xf32>
    %c6 = arith.constant 6 : index
    %79 = memref.load %arg1[%c6] : memref<10xf32, #tpu.memory_space<smem>>
    %c7 = arith.constant 7 : index
    %80 = memref.load %arg1[%c7] : memref<10xf32, #tpu.memory_space<smem>>
    %81 = vector.broadcast %79 : f32 to vector<16x32xf32>
    %82 = arith.addf %81, %78 : vector<16x32xf32>
    %cst_36 = arith.constant 1.000000e+01 : f32
    %83 = vector.broadcast %cst_36 : f32 to vector<16x32xf32>
    %84 = arith.mulf %82, %83 : vector<16x32xf32>
    %85 = arith.negf %84 : vector<16x32xf32>
    %86 = math.exp %85 : vector<16x32xf32>
    %cst_37 = arith.constant 1.000000e+00 : f32
    %87 = vector.broadcast %cst_37 : f32 to vector<16x32xf32>
    %88 = arith.addf %87, %86 : vector<16x32xf32>
    %89 = arith.divf %87, %88 : vector<16x32xf32>
    %cst_38 = arith.constant 1.000000e+00 : f32
    %90 = vector.broadcast %cst_38 : f32 to vector<16x32xf32>
    %91 = arith.subf %90, %89 : vector<16x32xf32>
    %92 = arith.mulf %52, %91 : vector<16x32xf32>
    %93 = vector.broadcast %80 : f32 to vector<16x32xf32>
    %94 = arith.mulf %92, %93 : vector<16x32xf32>
    %c1_39 = arith.constant 1 : index
    %c0_40 = arith.constant 0 : index
    %95 = vector.load %arg13[%c1_39, %c0_40] : memref<2x32xf32, #tpu.memory_space<vmem>>, vector<1x32xf32>
    %96 = vector.broadcast %95 : vector<1x32xf32> to vector<16x32xf32>
    %97 = arith.mulf %94, %96 : vector<16x32xf32>
    %cst_41 = arith.constant dense<0.000000e+00> : vector<16xf32>
    %98 = vector.multi_reduction <add>, %97, %cst_41 [1] : vector<16x32xf32> to vector<16xf32>
    %99 = vector.shape_cast %98 : vector<16xf32> to vector<16x1xf32>
    %c9 = arith.constant 9 : index
    %100 = memref.load %arg1[%c9] : memref<10xf32, #tpu.memory_space<smem>>
    %101 = vector.broadcast %100 : f32 to vector<16x1xf32>
    %102 = arith.addf %99, %101 : vector<16x1xf32>
    %103 = tpu.concatenate %77, %102 in 1 : vector<16x1xf32>, vector<16x1xf32> -> vector<16x2xf32>
    %c0_42 = arith.constant 0 : index
    %c0_43 = arith.constant 0 : index
    %104 = vector.load %arg14[%c0_42, %c0_43] : memref<16x2xf32, #tpu.memory_space<vmem>>, vector<16x2xf32>
    tpu.vector_store %arg14[%c0_42, %c0_43], %103 {strides = array<i32>} : memref<16x2xf32, #tpu.memory_space<vmem>>, vector<16x2xf32>,
    return
  }
  func.func @transform_0(%arg0: i32, %arg1: memref<10xf32, #tpu.memory_space<smem>>) -> (i32, i32) {
    %c0_i32 = arith.constant 0 : i32
    %c0_i32_0 = arith.constant 0 : i32
    return %arg0, %c0_i32 : i32, i32
  }
  func.func @transform_1(%arg0: i32, %arg1: memref<10xf32, #tpu.memory_space<smem>>) -> (i32, i32) {
    %c0_i32 = arith.constant 0 : i32
    %c0_i32_0 = arith.constant 0 : i32
    return %arg0, %c0_i32 : i32, i32
  }
  func.func @transform_2(%arg0: i32, %arg1: memref<10xf32, #tpu.memory_space<smem>>) -> (i32, i32) {
    %c0_i32 = arith.constant 0 : i32
    %c0_i32_0 = arith.constant 0 : i32
    return %arg0, %c0_i32 : i32, i32
  }
  func.func @transform_3(%arg0: i32, %arg1: memref<10xf32, #tpu.memory_space<smem>>) -> (i32, i32) {
    %c0_i32 = arith.constant 0 : i32
    %c0_i32_0 = arith.constant 0 : i32
    return %arg0, %c0_i32 : i32, i32
  }
  func.func @transform_4(%arg0: i32, %arg1: memref<10xf32, #tpu.memory_space<smem>>) -> (i32, i32) {
    %c0_i32 = arith.constant 0 : i32
    %c0_i32_0 = arith.constant 0 : i32
    return %arg0, %c0_i32 : i32, i32
  }
  func.func @transform_5(%arg0: i32, %arg1: memref<10xf32, #tpu.memory_space<smem>>) -> (i32, i32) {
    %c0_i32 = arith.constant 0 : i32
    %c0_i32_0 = arith.constant 0 : i32
    %c0_i32_1 = arith.constant 0 : i32
    return %c0_i32, %c0_i32_0 : i32, i32
  }
  func.func @transform_6(%arg0: i32, %arg1: memref<10xf32, #tpu.memory_space<smem>>) -> (i32, i32) {
    %c0_i32 = arith.constant 0 : i32
    %c0_i32_0 = arith.constant 0 : i32
    %c0_i32_1 = arith.constant 0 : i32
    return %c0_i32, %c0_i32_0 : i32, i32
  }
  func.func @transform_7(%arg0: i32, %arg1: memref<10xf32, #tpu.memory_space<smem>>) -> (i32, i32) {
    %c0_i32 = arith.constant 0 : i32
    %c0_i32_0 = arith.constant 0 : i32
    %c0_i32_1 = arith.constant 0 : i32
    return %c0_i32, %c0_i32_0 : i32, i32
  }
  func.func @transform_8(%arg0: i32, %arg1: memref<10xf32, #tpu.memory_space<smem>>) -> (i32, i32) {
    %c0_i32 = arith.constant 0 : i32
    %c0_i32_0 = arith.constant 0 : i32
    %c0_i32_1 = arith.constant 0 : i32
    return %c0_i32, %c0_i32_0 : i32, i32
  }
  func.func @transform_9(%arg0: i32, %arg1: memref<10xf32, #tpu.memory_space<smem>>) -> (i32, i32) {
    %c0_i32 = arith.constant 0 : i32
    %c0_i32_0 = arith.constant 0 : i32
    %c0_i32_1 = arith.constant 0 : i32
    return %c0_i32, %c0_i32_0 : i32, i32
  }
  func.func @transform_10(%arg0: i32, %arg1: memref<10xf32, #tpu.memory_space<smem>>) -> (i32, i32) {
    %c0_i32 = arith.constant 0 : i32
    %c0_i32_0 = arith.constant 0 : i32
    %c0_i32_1 = arith.constant 0 : i32
    return %c0_i32, %c0_i32_0 : i32, i32
  }
  func.func @transform_11(%arg0: i32, %arg1: memref<10xf32, #tpu.memory_space<smem>>) -> (i32, i32) {
    %c0_i32 = arith.constant 0 : i32
    %c0_i32_0 = arith.constant 0 : i32
    %c0_i32_1 = arith.constant 0 : i32
    return %c0_i32, %c0_i32_0 : i32, i32
  }
  func.func @transform_12(%arg0: i32, %arg1: memref<10xf32, #tpu.memory_space<smem>>) -> (i32, i32) {
    %c0_i32 = arith.constant 0 : i32
    %c0_i32_0 = arith.constant 0 : i32
    return %arg0, %c0_i32 : i32, i32
  }
}

</mosaic_0001>

<llo_original>
// kernel: tpu_custom_call.1
$region0: #{tpu_custom_call.1}
  #allocation0 [shape = 'u32[]', space=smem, size = 0x4, offset = 0x4, fixed_abs, tag = 'smem constant byte address 0x4 - core index']
  #allocation1 [shape = 'u32[144,128]{1,0:T(1,128)}', space=vmem, size = 0x12000, scoped, tag = 'internal scratch']
  #allocation2 [shape = 's32[1]{0}', space=sflag, size = 0x4, scoped, tag = 'scoped memory for tpu_custom_call.1']
  #allocation3 [shape = 'u8[512]{0}', space=smem, size = 0x200, scoped, tag = 'prefetched SMEM operand 0']
  %s0 = inlined_call_operand.vmem [shape: f32[10], index: 0, kind: input, shape index: {}]
  %s1 = inlined_call_operand.vmem [shape: f32[64,16], index: 1, kind: input, shape index: {}]
  %s2 = inlined_call_operand.vmem [shape: f32[64,32], index: 2, kind: input, shape index: {}]
  %s3 = inlined_call_operand.vmem [shape: f32[64,32], index: 3, kind: input, shape index: {}]
  %s4 = inlined_call_operand.vmem [shape: f32[64,32], index: 4, kind: input, shape index: {}]
  %s5 = inlined_call_operand.vmem [shape: f32[64,32], index: 5, kind: input, shape index: {}]
  %s6 = inlined_call_operand.vmem [shape: f32[16,32], index: 6, kind: input, shape index: {}]
  %s7 = inlined_call_operand.vmem [shape: f32[1,32], index: 7, kind: input, shape index: {}]
  %s8 = inlined_call_operand.vmem [shape: f32[32,32], index: 8, kind: input, shape index: {}]
  %s9 = inlined_call_operand.vmem [shape: f32[1,32], index: 9, kind: input, shape index: {}]
  %s10 = inlined_call_operand.vmem [shape: f32[32,32], index: 10, kind: input, shape index: {}]
  %s11 = inlined_call_operand.vmem [shape: f32[1,32], index: 11, kind: input, shape index: {}]
  %s12 = inlined_call_operand.vmem [shape: f32[2,32], index: 12, kind: input, shape index: {}]
  %s13 = inlined_call_operand.vmem [shape: f32[64,2], index: 13, kind: output, shape index: {}]
  %s14 = sld [smem:[#allocation0]]
  $region81: #{tpu_custom_call.1} parent=0
    _
  %s16 = ssub.s32 1, %s14
  %s17 = scalar_select 0, %s16, %s14
  %s18 = sshll.u32 %s0, 4
  %s19 = int_to_ptr.vmem [resolvable:$true] %s18
  %21 = dma.vmem_to_smem %s19, 16, [#allocation3], [#allocation2]
  %22 = dma.done [#allocation2], 16
  %23 = sfence
  loop: start=0, step=1, limit=6
  $region2: #{tpu_custom_call.1} parent=0 // loop_pre_header
    _
  $region3: #{tpu_custom_call.1} parent=0 // loop_header
    %s25 = sphi 0, %s29
    %p26 = scmp.ge.s32.totalorder %s25, 6
    %s35 = sphi 0, %s37
    %s38 = sphi 0, %s35
    %s39 = sphi 0, %s38
    %s55 = sphi 0, %s39
    %s61 = sphi 0, %s63
    %s64 = sphi 0, %s61
    %s65 = sphi 0, %s64
    %s81 = sphi 0, %s65
    %s87 = sphi 0, %s89
    %s90 = sphi 0, %s87
    %s91 = sphi 0, %s90
    %s107 = sphi 0, %s91
    %s113 = sphi 0, %s115
    %s116 = sphi 0, %s113
    %s117 = sphi 0, %s116
    %s133 = sphi 0, %s117
    %s139 = sphi 0, %s141
    %s142 = sphi 0, %s139
    %s143 = sphi 0, %s142
    %s159 = sphi 0, %s143
    %s163 = sphi 0, %s163
    %s165 = sphi 0, %s163
    %s166 = sphi 0, %s165
    %s180 = sphi 0, %s166
    %s184 = sphi 0, %s184
    %s186 = sphi 0, %s184
    %s187 = sphi 0, %s186
    %s201 = sphi 0, %s187
    %s205 = sphi 0, %s205
    %s207 = sphi 0, %s205
    %s208 = sphi 0, %s207
    %s222 = sphi 0, %s208
    %s226 = sphi 0, %s226
    %s228 = sphi 0, %s226
    %s229 = sphi 0, %s228
    %s243 = sphi 0, %s229
    %s247 = sphi 0, %s247
    %s249 = sphi 0, %s247
    %s250 = sphi 0, %s249
    %s264 = sphi 0, %s250
    %s268 = sphi 0, %s268
    %s270 = sphi 0, %s268
    %s271 = sphi 0, %s270
    %s285 = sphi 0, %s271
    %s289 = sphi 0, %s289
    %s291 = sphi 0, %s289
    %s292 = sphi 0, %s291
    %s306 = sphi 0, %s292
    %s312 = sphi 0, %s314
    %s315 = sphi 0, %s312
    %s316 = sphi 0, %s315
    %s332 = sphi 0, %s316
  $region4: #{tpu_custom_call.1} parent=0 // loop_header_branch
    %28 = sbr.rel (%p26) target = $region8
  $region5: #{tpu_custom_call.1} parent=0 // loop_body
    %s30 = ssub.s32 %s25, 1
    %s31 = ssub.s32 %s25, 2
    %s32 = sadd.s32 %s25, 1
    %s33 = ssub.s32 %s25, %s32
    %p34 = scmp.eq.s32.totalorder %s33, 0
    %s36 = sadd.s32 %s35, 1
    %s37 = scalar_select %p34, %s35, %s36
    %p40 = pneg %p34
    %p41 = scmp.eq.s32.totalorder %s25, 3
    %p42 = por %p40, %p41
    %p43 = scmp.ne.s32.totalorder %s35, %s38
    %p44 = scmp.eq.s32.totalorder %s25, 0
    %p45 = por %p43, %p44
    %p46 = scmp.ne.s32.totalorder %s35, %s38
    %p47 = scmp.eq.s32.totalorder %s30, 3
    %p48 = por %p46, %p47
    %p49 = scmp.ne.s32.totalorder %s38, %s39
    %p50 = scmp.eq.s32.totalorder %s30, 0
    %p51 = por %p49, %p50
    %p52 = scmp.ne.s32.totalorder %s38, %s39
    %p53 = scmp.eq.s32.totalorder %s31, 3
    %p54 = por %p52, %p53
    %p56 = scmp.ne.s32.totalorder %s39, %s55
    %p57 = scmp.eq.s32.totalorder %s31, 0
    %p58 = por %p56, %p57
    %s59 = ssub.s32 %s25, %s32
    %p60 = scmp.eq.s32.totalorder %s59, 0
    %s62 = sadd.s32 %s61, 1
    %s63 = scalar_select %p60, %s61, %s62
    %p66 = pneg %p60
    %p67 = scmp.eq.s32.totalorder %s25, 3
    %p68 = por %p66, %p67
    %p69 = scmp.ne.s32.totalorder %s61, %s64
    %p70 = scmp.eq.s32.totalorder %s25, 0
    %p71 = por %p69, %p70
    %p72 = scmp.ne.s32.totalorder %s61, %s64
    %p73 = scmp.eq.s32.totalorder %s30, 3
    %p74 = por %p72, %p73
    %p75 = scmp.ne.s32.totalorder %s64, %s65
    %p76 = scmp.eq.s32.totalorder %s30, 0
    %p77 = por %p75, %p76
    %p78 = scmp.ne.s32.totalorder %s64, %s65
    %p79 = scmp.eq.s32.totalorder %s31, 3
    %p80 = por %p78, %p79
    %p82 = scmp.ne.s32.totalorder %s65, %s81
    %p83 = scmp.eq.s32.totalorder %s31, 0
    %p84 = por %p82, %p83
    %s85 = ssub.s32 %s25, %s32
    %p86 = scmp.eq.s32.totalorder %s85, 0
    %s88 = sadd.s32 %s87, 1
    %s89 = scalar_select %p86, %s87, %s88
    %p92 = pneg %p86
    %p93 = scmp.eq.s32.totalorder %s25, 3
    %p94 = por %p92, %p93
    %p95 = scmp.ne.s32.totalorder %s87, %s90
    %p96 = scmp.eq.s32.totalorder %s25, 0
    %p97 = por %p95, %p96
    %p98 = scmp.ne.s32.totalorder %s87, %s90
    %p99 = scmp.eq.s32.totalorder %s30, 3
    %p100 = por %p98, %p99
    %p101 = scmp.ne.s32.totalorder %s90, %s91
    %p102 = scmp.eq.s32.totalorder %s30, 0
    %p103 = por %p101, %p102
    %p104 = scmp.ne.s32.totalorder %s90, %s91
    %p105 = scmp.eq.s32.totalorder %s31, 3
    %p106 = por %p104, %p105
    %p108 = scmp.ne.s32.totalorder %s91, %s107
    %p109 = scmp.eq.s32.totalorder %s31, 0
    %p110 = por %p108, %p109
    %s111 = ssub.s32 %s25, %s32
    %p112 = scmp.eq.s32.totalorder %s111, 0
    %s114 = sadd.s32 %s113, 1
    %s115 = scalar_select %p112, %s113, %s114
    %p118 = pneg %p112
    %p119 = scmp.eq.s32.totalorder %s25, 3
    %p120 = por %p118, %p119
    %p121 = scmp.ne.s32.totalorder %s113, %s116
    %p122 = scmp.eq.s32.totalorder %s25, 0
    %p123 = por %p121, %p122
    %p124 = scmp.ne.s32.totalorder %s113, %s116
    %p125 = scmp.eq.s32.totalorder %s30, 3
    %p126 = por %p124, %p125
    %p127 = scmp.ne.s32.totalorder %s116, %s117
    %p128 = scmp.eq.s32.totalorder %s30, 0
    %p129 = por %p127, %p128
    %p130 = scmp.ne.s32.totalorder %s116, %s117
    %p131 = scmp.eq.s32.totalorder %s31, 3
    %p132 = por %p130, %p131
    %p134 = scmp.ne.s32.totalorder %s117, %s133
    %p135 = scmp.eq.s32.totalorder %s31, 0
    %p136 = por %p134, %p135
    %s137 = ssub.s32 %s25, %s32
    %p138 = scmp.eq.s32.totalorder %s137, 0
    %s140 = sadd.s32 %s139, 1
    %s141 = scalar_select %p138, %s139, %s140
    %p144 = pneg %p138
    %p145 = scmp.eq.s32.totalorder %s25, 3
    %p146 = por %p144, %p145
    %p147 = scmp.ne.s32.totalorder %s139, %s142
    %p148 = scmp.eq.s32.totalorder %s25, 0
    %p149 = por %p147, %p148
    %p150 = scmp.ne.s32.totalorder %s139, %s142
    %p151 = scmp.eq.s32.totalorder %s30, 3
    %p152 = por %p150, %p151
    %p153 = scmp.ne.s32.totalorder %s142, %s143
    %p154 = scmp.eq.s32.totalorder %s30, 0
    %p155 = por %p153, %p154
    %p156 = scmp.ne.s32.totalorder %s142, %s143
    %p157 = scmp.eq.s32.totalorder %s31, 3
    %p158 = por %p156, %p157
    %p160 = scmp.ne.s32.totalorder %s143, %s159
    %p161 = scmp.eq.s32.totalorder %s31, 0
    %p162 = por %p160, %p161
    %s164 = sadd.s32 %s163, 1
    %p167 = scmp.eq.s32.totalorder %s25, 3
    %p168 = scmp.ne.s32.totalorder %s163, %s165
    %p169 = scmp.eq.s32.totalorder %s25, 0
    %p170 = por %p168, %p169
    %p171 = scmp.ne.s32.totalorder %s163, %s165
    %p172 = scmp.eq.s32.totalorder %s30, 3
    %p173 = por %p171, %p172
    %p174 = scmp.ne.s32.totalorder %s165, %s166
    %p175 = scmp.eq.s32.totalorder %s30, 0
    %p176 = por %p174, %p175
    %p177 = scmp.ne.s32.totalorder %s165, %s166
    %p178 = scmp.eq.s32.totalorder %s31, 3
    %p179 = por %p177, %p178
    %p181 = scmp.ne.s32.totalorder %s166, %s180
    %p182 = scmp.eq.s32.totalorder %s31, 0
    %p183 = por %p181, %p182
    %s185 = sadd.s32 %s184, 1
    %p188 = scmp.eq.s32.totalorder %s25, 3
    %p189 = scmp.ne.s32.totalorder %s184, %s186
    %p190 = scmp.eq.s32.totalorder %s25, 0
    %p191 = por %p189, %p190
    %p192 = scmp.ne.s32.totalorder %s184, %s186
    %p193 = scmp.eq.s32.totalorder %s30, 3
    %p194 = por %p192, %p193
    %p195 = scmp.ne.s32.totalorder %s186, %s187
    %p196 = scmp.eq.s32.totalorder %s30, 0
    %p197 = por %p195, %p196
    %p198 = scmp.ne.s32.totalorder %s186, %s187
    %p199 = scmp.eq.s32.totalorder %s31, 3
    %p200 = por %p198, %p199
    %p202 = scmp.ne.s32.totalorder %s187, %s201
    %p203 = scmp.eq.s32.totalorder %s31, 0
    %p204 = por %p202, %p203
    %s206 = sadd.s32 %s205, 1
    %p209 = scmp.eq.s32.totalorder %s25, 3
    %p210 = scmp.ne.s32.totalorder %s205, %s207
    %p211 = scmp.eq.s32.totalorder %s25, 0
    %p212 = por %p210, %p211
    %p213 = scmp.ne.s32.totalorder %s205, %s207
    %p214 = scmp.eq.s32.totalorder %s30, 3
    %p215 = por %p213, %p214
    %p216 = scmp.ne.s32.totalorder %s207, %s208
    %p217 = scmp.eq.s32.totalorder %s30, 0
    %p218 = por %p216, %p217
    %p219 = scmp.ne.s32.totalorder %s207, %s208
    %p220 = scmp.eq.s32.totalorder %s31, 3
    %p221 = por %p219, %p220
    %p223 = scmp.ne.s32.totalorder %s208, %s222
    %p224 = scmp.eq.s32.totalorder %s31, 0
    %p225 = por %p223, %p224
    %s227 = sadd.s32 %s226, 1
    %p230 = scmp.eq.s32.totalorder %s25, 3
    %p231 = scmp.ne.s32.totalorder %s226, %s228
    %p232 = scmp.eq.s32.totalorder %s25, 0
    %p233 = por %p231, %p232
    %p234 = scmp.ne.s32.totalorder %s226, %s228
    %p235 = scmp.eq.s32.totalorder %s30, 3
    %p236 = por %p234, %p235
    %p237 = scmp.ne.s32.totalorder %s228, %s229
    %p238 = scmp.eq.s32.totalorder %s30, 0
    %p239 = por %p237, %p238
    %p240 = scmp.ne.s32.totalorder %s228, %s229
    %p241 = scmp.eq.s32.totalorder %s31, 3
    %p242 = por %p240, %p241
    %p244 = scmp.ne.s32.totalorder %s229, %s243
    %p245 = scmp.eq.s32.totalorder %s31, 0
    %p246 = por %p244, %p245
    %s248 = sadd.s32 %s247, 1
    %p251 = scmp.eq.s32.totalorder %s25, 3
    %p252 = scmp.ne.s32.totalorder %s247, %s249
    %p253 = scmp.eq.s32.totalorder %s25, 0
    %p254 = por %p252, %p253
    %p255 = scmp.ne.s32.totalorder %s247, %s249
    %p256 = scmp.eq.s32.totalorder %s30, 3
    %p257 = por %p255, %p256
    %p258 = scmp.ne.s32.totalorder %s249, %s250
    %p259 = scmp.eq.s32.totalorder %s30, 0
    %p260 = por %p258, %p259
    %p261 = scmp.ne.s32.totalorder %s249, %s250
    %p262 = scmp.eq.s32.totalorder %s31, 3
    %p263 = por %p261, %p262
    %p265 = scmp.ne.s32.totalorder %s250, %s264
    %p266 = scmp.eq.s32.totalorder %s31, 0
    %p267 = por %p265, %p266
    %s269 = sadd.s32 %s268, 1
    %p272 = scmp.eq.s32.totalorder %s25, 3
    %p273 = scmp.ne.s32.totalorder %s268, %s270
    %p274 = scmp.eq.s32.totalorder %s25, 0
    %p275 = por %p273, %p274
    %p276 = scmp.ne.s32.totalorder %s268, %s270
    %p277 = scmp.eq.s32.totalorder %s30, 3
    %p278 = por %p276, %p277
    %p279 = scmp.ne.s32.totalorder %s270, %s271
    %p280 = scmp.eq.s32.totalorder %s30, 0
    %p281 = por %p279, %p280
    %p282 = scmp.ne.s32.totalorder %s270, %s271
    %p283 = scmp.eq.s32.totalorder %s31, 3
    %p284 = por %p282, %p283
    %p286 = scmp.ne.s32.totalorder %s271, %s285
    %p287 = scmp.eq.s32.totalorder %s31, 0
    %p288 = por %p286, %p287
    %s290 = sadd.s32 %s289, 1
    %p293 = scmp.eq.s32.totalorder %s25, 3
    %p294 = scmp.ne.s32.totalorder %s289, %s291
    %p295 = scmp.eq.s32.totalorder %s25, 0
    %p296 = por %p294, %p295
    %p297 = scmp.ne.s32.totalorder %s289, %s291
    %p298 = scmp.eq.s32.totalorder %s30, 3
    %p299 = por %p297, %p298
    %p300 = scmp.ne.s32.totalorder %s291, %s292
    %p301 = scmp.eq.s32.totalorder %s30, 0
    %p302 = por %p300, %p301
    %p303 = scmp.ne.s32.totalorder %s291, %s292
    %p304 = scmp.eq.s32.totalorder %s31, 3
    %p305 = por %p303, %p304
    %p307 = scmp.ne.s32.totalorder %s292, %s306
    %p308 = scmp.eq.s32.totalorder %s31, 0
    %p309 = por %p307, %p308
    %s310 = ssub.s32 %s25, %s32
    %p311 = scmp.eq.s32.totalorder %s310, 0
    %s313 = sadd.s32 %s312, 1
    %s314 = scalar_select %p311, %s312, %s313
    %p317 = pneg %p311
    %p318 = scmp.eq.s32.totalorder %s25, 3
    %p319 = por %p317, %p318
    %p320 = scmp.ne.s32.totalorder %s312, %s315
    %p321 = scmp.eq.s32.totalorder %s25, 0
    %p322 = por %p320, %p321
    %p323 = scmp.ne.s32.totalorder %s312, %s315
    %p324 = scmp.eq.s32.totalorder %s30, 3
    %p325 = por %p323, %p324
    %p326 = scmp.ne.s32.totalorder %s315, %s316
    %p327 = scmp.eq.s32.totalorder %s30, 0
    %p328 = por %p326, %p327
    %p329 = scmp.ne.s32.totalorder %s315, %s316
    %p330 = scmp.eq.s32.totalorder %s31, 3
    %p331 = por %p329, %p330
    %p333 = scmp.ne.s32.totalorder %s316, %s332
    %p334 = scmp.eq.s32.totalorder %s31, 0
    %p335 = por %p333, %p334
    %p336 = scmp.le.s32.totalorder 1, %s25
    %p337 = scmp.lt.s32.totalorder %s25, 5
    %p338 = pnand %p336, %p337
    %p339 = pneg %p338
    // Predicated region
    $region9: #{tpu_custom_call.1} parent=5 // pred_check
      _
    $region10: #{tpu_custom_call.1} parent=5 // pred_check_branch
      %341 = sbr.rel (%p338) target = $region12
    $region11: #{tpu_custom_call.1} parent=5 // pred_region
      %s342 = ssub.s32 %s25, 1
      // Predicated region
      $region13: #{tpu_custom_call.1} parent=11 // pred_check
        %p343 = pneg %p176
      $region14: #{tpu_custom_call.1} parent=11 // pred_check_branch
        %345 = sbr.rel (%p343) target = $region16
      $region15: #{tpu_custom_call.1} parent=11 // pred_region
        _
      $region16: #{tpu_custom_call.1} parent=11 // pred_fallthru
        _
      // Predicated region
      $region17: #{tpu_custom_call.1} parent=11 // pred_check
        %p346 = pneg %p197
      $region18: #{tpu_custom_call.1} parent=11 // pred_check_branch
        %348 = sbr.rel (%p346) target = $region20
      $region19: #{tpu_custom_call.1} parent=11 // pred_region
        _
      $region20: #{tpu_custom_call.1} parent=11 // pred_fallthru
        _
      // Predicated region
      $region21: #{tpu_custom_call.1} parent=11 // pred_check
        %p349 = pneg %p218
      $region22: #{tpu_custom_call.1} parent=11 // pred_check_branch
        %351 = sbr.rel (%p349) target = $region24
      $region23: #{tpu_custom_call.1} parent=11 // pred_region
        _
      $region24: #{tpu_custom_call.1} parent=11 // pred_fallthru
        _
      // Predicated region
      $region25: #{tpu_custom_call.1} parent=11 // pred_check
        %p352 = pneg %p239
      $region26: #{tpu_custom_call.1} parent=11 // pred_check_branch
        %354 = sbr.rel (%p352) target = $region28
      $region27: #{tpu_custom_call.1} parent=11 // pred_region
        _
      $region28: #{tpu_custom_call.1} parent=11 // pred_fallthru
        _
      // Predicated region
      $region29: #{tpu_custom_call.1} parent=11 // pred_check
        %p355 = pneg %p260
      $region30: #{tpu_custom_call.1} parent=11 // pred_check_branch
        %357 = sbr.rel (%p355) target = $region32
      $region31: #{tpu_custom_call.1} parent=11 // pred_region
        _
      $region32: #{tpu_custom_call.1} parent=11 // pred_fallthru
        _
      // Predicated region
      $region33: #{tpu_custom_call.1} parent=11 // pred_check
        %p358 = pneg %p281
      $region34: #{tpu_custom_call.1} parent=11 // pred_check_branch
        %360 = sbr.rel (%p358) target = $region36
      $region35: #{tpu_custom_call.1} parent=11 // pred_region
        _
      $region36: #{tpu_custom_call.1} parent=11 // pred_fallthru
        _
      // Predicated region
      $region37: #{tpu_custom_call.1} parent=11 // pred_check
        %p361 = pneg %p302
      $region38: #{tpu_custom_call.1} parent=11 // pred_check_branch
        %363 = sbr.rel (%p361) target = $region40
      $region39: #{tpu_custom_call.1} parent=11 // pred_region
        _
      $region40: #{tpu_custom_call.1} parent=11 // pred_fallthru
        _
    $region12: #{tpu_custom_call.1} parent=5 // pred_fallthru
      _
    %p364 = scmp.lt.s32.totalorder %s25, 4
    // Predicated region
    $region41: #{tpu_custom_call.1} parent=5 // pred_check
      %p365 = pneg %p364
    $region42: #{tpu_custom_call.1} parent=5 // pred_check_branch
      %367 = sbr.rel (%p365) target = $region44
    $region43: #{tpu_custom_call.1} parent=5 // pred_region
      // Predicated region
      $region45: #{tpu_custom_call.1} parent=43 // pred_check
        %p368 = pneg %p45
      $region46: #{tpu_custom_call.1} parent=43 // pred_check_branch
        %370 = sbr.rel (%p368) target = $region48
      $region47: #{tpu_custom_call.1} parent=43 // pred_region
        %s371 = smul.u32 2, %s25
        %p372 = scmp.lt.s32.totalorder %s371, 7
        %s373 = scalar_select %p372, %s371, 7
        %s374 = smul.addr %s373, 8
        %s375 = scalar_lea.vmem %s1, %s374
        %s376 = smul.u32 2, %s25
      $region48: #{tpu_custom_call.1} parent=43 // pred_fallthru
        _
      // Predicated region
      $region49: #{tpu_custom_call.1} parent=43 // pred_check
        %p377 = pneg %p71
      $region50: #{tpu_custom_call.1} parent=43 // pred_check_branch
        %379 = sbr.rel (%p377) target = $region52
      $region51: #{tpu_custom_call.1} parent=43 // pred_region
        %s380 = smul.u32 2, %s25
        %p381 = scmp.lt.s32.totalorder %s380, 7
        %s382 = scalar_select %p381, %s380, 7
        %s383 = smul.addr %s382, 8
        %s384 = scalar_lea.vmem %s2, %s383
        %s385 = smul.u32 2, %s25
      $region52: #{tpu_custom_call.1} parent=43 // pred_fallthru
        _
      // Predicated region
      $region53: #{tpu_custom_call.1} parent=43 // pred_check
        %p386 = pneg %p97
      $region54: #{tpu_custom_call.1} parent=43 // pred_check_branch
        %388 = sbr.rel (%p386) target = $region56
      $region55: #{tpu_custom_call.1} parent=43 // pred_region
        %s389 = smul.u32 2, %s25
        %p390 = scmp.lt.s32.totalorder %s389, 7
        %s391 = scalar_select %p390, %s389, 7
        %s392 = smul.addr %s391, 8
        %s393 = scalar_lea.vmem %s3, %s392
        %s394 = smul.u32 2, %s25
      $region56: #{tpu_custom_call.1} parent=43 // pred_fallthru
        _
      // Predicated region
      $region57: #{tpu_custom_call.1} parent=43 // pred_check
        %p395 = pneg %p123
      $region58: #{tpu_custom_call.1} parent=43 // pred_check_branch
        %397 = sbr.rel (%p395) target = $region60
      $region59: #{tpu_custom_call.1} parent=43 // pred_region
        %s398 = smul.u32 2, %s25
        %p399 = scmp.lt.s32.totalorder %s398, 7
        %s400 = scalar_select %p399, %s398, 7
        %s401 = smul.addr %s400, 8
        %s402 = scalar_lea.vmem %s4, %s401
        %s403 = smul.u32 2, %s25
      $region60: #{tpu_custom_call.1} parent=43 // pred_fallthru
        _
      // Predicated region
      $region61: #{tpu_custom_call.1} parent=43 // pred_check
        %p404 = pneg %p149
      $region62: #{tpu_custom_call.1} parent=43 // pred_check_branch
        %406 = sbr.rel (%p404) target = $region64
      $region63: #{tpu_custom_call.1} parent=43 // pred_region
        %s407 = smul.u32 2, %s25
        %p408 = scmp.lt.s32.totalorder %s407, 7
        %s409 = scalar_select %p408, %s407, 7
        %s410 = smul.addr %s409, 8
        %s411 = scalar_lea.vmem %s5, %s410
        %s412 = smul.u32 2, %s25
      $region64: #{tpu_custom_call.1} parent=43 // pred_fallthru
        _
    $region44: #{tpu_custom_call.1} parent=5 // pred_fallthru
      _
    %p413 = scmp.le.s32.totalorder 1, %s25
    %p414 = scmp.lt.s32.totalorder %s25, 5
    %p415 = pnand %p413, %p414
    %p416 = pneg %p415
    // Predicated region
    $region65: #{tpu_custom_call.1} parent=5 // pred_check
      _
    $region66: #{tpu_custom_call.1} parent=5 // pred_check_branch
      %418 = sbr.rel (%p415) target = $region68
    $region67: #{tpu_custom_call.1} parent=5 // pred_region
      %s419 = ssub.s32 %s25, 1
      %s420 = smul.u32 2, %s30
      %p421 = scmp.lt.s32.totalorder %s420, 7
      %s422 = scalar_select %p421, %s420, 7
      %s423 = smul.addr %s422, 8
      %s424 = scalar_lea.vmem %s1, %s423
      %p425 = pneg %p51
      %p426 = pneg %p48
      %s427 = smul.u32 2, %s30
      %p428 = scmp.lt.s32.totalorder %s427, 7
      %s429 = scalar_select %p428, %s427, 7
      %s430 = smul.addr %s429, 8
      %s431 = scalar_lea.vmem %s2, %s430
      %p432 = pneg %p77
      %p433 = pneg %p74
      %s434 = smul.u32 2, %s30
      %p435 = scmp.lt.s32.totalorder %s434, 7
      %s436 = scalar_select %p435, %s434, 7
      %s437 = smul.addr %s436, 8
      %s438 = scalar_lea.vmem %s3, %s437
      %p439 = pneg %p103
      %p440 = pneg %p100
      %s441 = smul.u32 2, %s30
      %p442 = scmp.lt.s32.totalorder %s441, 7
      %s443 = scalar_select %p442, %s441, 7
      %s444 = smul.addr %s443, 8
      %s445 = scalar_lea.vmem %s4, %s444
      %p446 = pneg %p129
      %p447 = pneg %p126
      %s448 = smul.u32 2, %s30
      %p449 = scmp.lt.s32.totalorder %s448, 7
      %s450 = scalar_select %p449, %s448, 7
      %s451 = smul.addr %s450, 8
      %s452 = scalar_lea.vmem %s5, %s451
      %p453 = pneg %p155
      %p454 = pneg %p152
      %p455 = pneg %p176
      %p456 = pneg %p173
      %p457 = pneg %p197
      %p458 = pneg %p194
      %p459 = pneg %p218
      %p460 = pneg %p215
      %p461 = pneg %p239
      %p462 = pneg %p236
      %p463 = pneg %p260
      %p464 = pneg %p257
      %p465 = pneg %p281
      %p466 = pneg %p278
      %p467 = pneg %p302
      %p468 = pneg %p299
      %p469 = pneg %p328
      %p470 = pneg %p325
      %s471 = smul.u32 2, %s30
      %p472 = scmp.lt.s32.totalorder %s471, 7
      %s473 = scalar_select %p472, %s471, 7
      %s474 = smul.addr %s473, 8
      %s475 = scalar_lea.vmem %s13, %s474
      %s476 = smul.u32 2, %s30
      %p477 = scmp.lt.s32.totalorder %s476, 7
      %s478 = scalar_select %p477, %s476, 7
      %s479 = smul.addr %s478, 8
      %s480 = scalar_lea.vmem %s1, %s479
      %s481 = smul.u32 2, %s30
      %s482 = smul.u32 2, %s30
      %p483 = scmp.lt.s32.totalorder %s482, 7
      %s484 = scalar_select %p483, %s482, 7
      %s485 = smul.addr %s484, 8
      %s486 = scalar_lea.vmem %s2, %s485
      %s487 = smul.u32 2, %s30
      %s488 = smul.u32 2, %s30
      %p489 = scmp.lt.s32.totalorder %s488, 7
      %s490 = scalar_select %p489, %s488, 7
      %s491 = smul.addr %s490, 8
      %s492 = scalar_lea.vmem %s3, %s491
      %s493 = smul.u32 2, %s30
      %s494 = smul.u32 2, %s30
      %p495 = scmp.lt.s32.totalorder %s494, 7
      %s496 = scalar_select %p495, %s494, 7
      %s497 = smul.addr %s496, 8
      %s498 = scalar_lea.vmem %s4, %s497
      %s499 = smul.u32 2, %s30
      %s500 = smul.u32 2, %s30
      %p501 = scmp.lt.s32.totalorder %s500, 7
      %s502 = scalar_select %p501, %s500, 7
      %s503 = smul.addr %s502, 8
      %s504 = scalar_lea.vmem %s5, %s503
      %s505 = smul.u32 2, %s30
      %s506 = smul.u32 2, %s30
      %p507 = scmp.lt.s32.totalorder %s506, 7
      %s508 = scalar_select %p507, %s506, 7
      %s509 = smul.addr %s508, 8
      %s510 = scalar_lea.vmem %s13, %s509
      %s511 = smul.u32 2, %s30
      %v512 = vld [vmem:[%s480] sm:$0xff]
      %v513 = vld [vmem:[%s480 + $0x8] sm:$0xff]
      %v514 = vld [vmem:[%s6] sm:$0xff]
      %v515 = vld [vmem:[%s6 + $0x8] sm:$0xff]
      %v516 = vld [vmem:[%s7] sm:$0x1]
      %v518 = vlaneseq
      %v519 = vshrl.u32 %v518, 7
      %v520 = vsub.s32 0, %v519
      %v521 = vrot.slane %v516, %v520
      %vm523 = vcmask 130048
      %v525 = vsel %vm523, %v512, 0
      %v528 = vsel %vm523, %v513, 0
      %530 = vmatprep.subr.mxu0 0.0
      %531 = vmatpush1.msra.mxu0 %v514
      %532 = vmatprep.subr.mxu0 0.0
      %533 = vmatpush1.msra.mxu0 %v515
      %534 = vmatprep.subr.mxu0 0.0
      %535 = vmatpush1.msra.mxu0 0.0
      %536 = vmatprep.subr.mxu0 0.0
      %537 = vmatpush1.msra.mxu0 0.0
      %538 = vmatprep.subr.mxu0 0.0
      %539 = vmatpush1.msra.mxu0 0.0
      %540 = vmatprep.subr.mxu0 0.0
      %541 = vmatpush1.msra.mxu0 0.0
      %542 = vmatprep.subr.mxu0 0.0
      %543 = vmatpush1.msra.mxu0 0.0
      %544 = vmatprep.subr.mxu0 0.0
      %545 = vmatpush1.msra.mxu0 0.0
      %546 = vmatprep.subr.mxu0 0.0
      %547 = vmatpush1.msra.mxu0 0.0
      %548 = vmatprep.subr.mxu0 0.0
      %549 = vmatpush1.msra.mxu0 0.0
      %550 = vmatprep.subr.mxu0 0.0
      %551 = vmatpush1.msra.mxu0 0.0
      %552 = vmatprep.subr.mxu0 0.0
      %553 = vmatpush1.msra.mxu0 0.0
      %554 = vmatprep.subr.mxu0 0.0
      %555 = vmatpush1.msra.mxu0 0.0
      %556 = vmatprep.subr.mxu0 0.0
      %557 = vmatpush1.msra.mxu0 0.0
      %558 = vmatprep.subr.mxu0 0.0
      %559 = vmatpush1.msra.mxu0 0.0
      %560 = vmatprep.subr.mxu0 0.0
      %561 = vmatpush1.msra.mxu0 0.0
      %562 = vmatprep.subr.mxu0 0.0
      %563 = vmatpush1.msra.mxu0 0.0
      %564 = vmatprep.subr.mxu0 0.0
      %565 = vmatpush1.msra.mxu0 0.0
      %566 = vmatprep.subr.mxu0 0.0
      %567 = vmatpush1.msra.mxu0 0.0
      %568 = vmatprep.subr.mxu0 0.0
      %569 = vmatpush1.msra.mxu0 0.0
      %570 = vmatprep.subr.mxu0 0.0
      %571 = vmatpush1.msra.mxu0 0.0
      %572 = vmatprep.subr.mxu0 0.0
      %573 = vmatpush1.msra.mxu0 0.0
      %574 = vmatprep.subr.mxu0 0.0
      %575 = vmatpush1.msra.mxu0 0.0
      %576 = vmatprep.subr.mxu0 0.0
      %577 = vmatpush1.msra.mxu0 0.0
      %578 = vmatprep.subr.mxu0 0.0
      %579 = vmatpush1.msra.mxu0 0.0
      %580 = vmatprep.subr.mxu0 0.0
      %581 = vmatpush1.msra.mxu0 0.0
      %582 = vmatprep.subr.mxu0 0.0
      %583 = vmatpush1.msra.mxu0 0.0
      %584 = vmatprep.subr.mxu0 0.0
      %585 = vmatpush1.msra.mxu0 0.0
      %586 = vmatprep.subr.mxu0 0.0
      %587 = vmatpush1.msra.mxu0 0.0
      %588 = vmatprep.subr.mxu0 0.0
      %589 = vmatpush1.msra.mxu0 0.0
      %590 = vmatprep.subr.mxu0 0.0
      %591 = vmatpush1.msra.mxu0 0.0
      %592 = vmatprep.subr.mxu0 0.0
      %593 = vmatpush1.msra.mxu0 0.0
      %594 = vmatprep.mubr.f32.mxu0 0.0
      %595 = vmatmul.mubr.f32.gmra.mrb[0].mxu0 %v525
      %v596 = vpop.f32.mrb[0].mxu0
      %v597 = vadd.f32 %v521, %v596
      %v598 = vpop.f32.mrb[0].mxu0
      %599 = vmatprep.mubr.f32.mxu0 0.0
      %600 = vmatmul.mubr.f32.gmra.mrb[0].mxu0 %v528
      %v601 = vpop.f32.mrb[0].mxu0
      %v602 = vadd.f32 %v521, %v601
      %v603 = vpop.f32.mrb[0].mxu0
      %604 = vdwg.mxu0
      %v605 = vtanh.pop %v597
      %v606 = vtanh.pop %v602
      %v607 = vld [vmem:[%s486] sm:$0xff]
      %v608 = vld [vmem:[%s486 + $0x8] sm:$0xff]
      %s609 = sld [smem:[#allocation3]]
      %s610 = sld [smem:[#allocation3 + $0x1]]
      %v611 = vstv %s609
      %v612 = vadd.f32 %v611, %v607
      %v613 = vadd.f32 %v611, %v608
      %v614 = vmul.f32 %v612, 10.0
      %v615 = vmul.f32 %v613, 10.0
      %v616 = vxor.u32 %v614, 2147483648
      %v617 = vxor.u32 %v615, 2147483648
      %v618 = vmul.f32 %v616, 1.442695
      %v619 = vpow.pop %v618
      %v620 = vmul.f32 %v617, 1.442695
      %v621 = vpow.pop %v620
      %v622 = vadd.f32 %v619, 1.0
      %v623 = vadd.f32 %v621, 1.0
      %v624 = vrcp.pop %v622
      %v625 = vmul.f32 1.0, %v624
      %v626 = vrcp.pop %v623
      %v627 = vmul.f32 1.0, %v626
      %v628 = vsub.f32 1.0, %v625
      %v629 = vsub.f32 1.0, %v627
      %v630 = vmul.f32 %v605, %v628
      %v631 = vmul.f32 %v606, %v629
      %v632 = vstv %s610
      %v633 = vmul.f32 %v630, %v632
      %v634 = vmul.f32 %v631, %v632
      %v635 = vld [vmem:[%s8] sm:$0xff]
      %v636 = vld [vmem:[%s8 + $0x8] sm:$0xff]
      %v637 = vld [vmem:[%s8 + $0x10] sm:$0xff]
      %v638 = vld [vmem:[%s8 + $0x18] sm:$0xff]
      %v639 = vld [vmem:[%s9] sm:$0x1]
      %v641 = vlaneseq
      %v642 = vshrl.u32 %v641, 7
      %v643 = vsub.s32 0, %v642
      %v644 = vrot.slane %v639, %v643
      %vm646 = vcmask 261120
      %v648 = vsel %vm646, %v633, 0
      %v651 = vsel %vm646, %v634, 0
      %653 = vmatprep.subr.mxu0 0.0
      %654 = vmatpush1.msra.mxu0 %v635
      %655 = vmatprep.subr.mxu0 0.0
      %656 = vmatpush1.msra.mxu0 %v636
      %657 = vmatprep.subr.mxu0 0.0
      %658 = vmatpush1.msra.mxu0 %v637
      %659 = vmatprep.subr.mxu0 0.0
      %660 = vmatpush1.msra.mxu0 %v638
      %661 = vmatprep.subr.mxu0 0.0
      %662 = vmatpush1.msra.mxu0 0.0
      %663 = vmatprep.subr.mxu0 0.0
      %664 = vmatpush1.msra.mxu0 0.0
      %665 = vmatprep.subr.mxu0 0.0
      %666 = vmatpush1.msra.mxu0 0.0
      %667 = vmatprep.subr.mxu0 0.0
      %668 = vmatpush1.msra.mxu0 0.0
      %669 = vmatprep.subr.mxu0 0.0
      %670 = vmatpush1.msra.mxu0 0.0
      %671 = vmatprep.subr.mxu0 0.0
      %672 = vmatpush1.msra.mxu0 0.0
      %673 = vmatprep.subr.mxu0 0.0
      %674 = vmatpush1.msra.mxu0 0.0
      %675 = vmatprep.subr.mxu0 0.0
      %676 = vmatpush1.msra.mxu0 0.0
      %677 = vmatprep.subr.mxu0 0.0
      %678 = vmatpush1.msra.mxu0 0.0
      %679 = vmatprep.subr.mxu0 0.0
      %680 = vmatpush1.msra.mxu0 0.0
      %681 = vmatprep.subr.mxu0 0.0
      %682 = vmatpush1.msra.mxu0 0.0
      %683 = vmatprep.subr.mxu0 0.0
      %684 = vmatpush1.msra.mxu0 0.0
      %685 = vmatprep.subr.mxu0 0.0
      %686 = vmatpush1.msra.mxu0 0.0
      %687 = vmatprep.subr.mxu0 0.0
      %688 = vmatpush1.msra.mxu0 0.0
      %689 = vmatprep.subr.mxu0 0.0
      %690 = vmatpush1.msra.mxu0 0.0
      %691 = vmatprep.subr.mxu0 0.0
      %692 = vmatpush1.msra.mxu0 0.0
      %693 = vmatprep.subr.mxu0 0.0
      %694 = vmatpush1.msra.mxu0 0.0
      %695 = vmatprep.subr.mxu0 0.0
      %696 = vmatpush1.msra.mxu0 0.0
      %697 = vmatprep.subr.mxu0 0.0
      %698 = vmatpush1.msra.mxu0 0.0
      %699 = vmatprep.subr.mxu0 0.0
      %700 = vmatpush1.msra.mxu0 0.0
      %701 = vmatprep.subr.mxu0 0.0
      %702 = vmatpush1.msra.mxu0 0.0
      %703 = vmatprep.subr.mxu0 0.0
      %704 = vmatpush1.msra.mxu0 0.0
      %705 = vmatprep.subr.mxu0 0.0
      %706 = vmatpush1.msra.mxu0 0.0
      %707 = vmatprep.subr.mxu0 0.0
      %708 = vmatpush1.msra.mxu0 0.0
      %709 = vmatprep.subr.mxu0 0.0
      %710 = vmatpush1.msra.mxu0 0.0
      %711 = vmatprep.subr.mxu0 0.0
      %712 = vmatpush1.msra.mxu0 0.0
      %713 = vmatprep.subr.mxu0 0.0
      %714 = vmatpush1.msra.mxu0 0.0
      %715 = vmatprep.subr.mxu0 0.0
      %716 = vmatpush1.msra.mxu0 0.0
      %717 = vmatprep.mubr.f32.mxu0 0.0
      %718 = vmatmul.mubr.f32.gmra.mrb[0].mxu0 %v648
      %v719 = vpop.f32.mrb[0].mxu0
      %v720 = vadd.f32 %v644, %v719
      %v721 = vpop.f32.mrb[0].mxu0
      %722 = vmatprep.mubr.f32.mxu0 0.0
      %723 = vmatmul.mubr.f32.gmra.mrb[0].mxu0 %v651
      %v724 = vpop.f32.mrb[0].mxu0
      %v725 = vadd.f32 %v644, %v724
      %v726 = vpop.f32.mrb[0].mxu0
      %727 = vdwg.mxu0
      %v728 = vtanh.pop %v720
      %v729 = vtanh.pop %v725
      %v730 = vld [vmem:[%s492] sm:$0xff]
      %v731 = vld [vmem:[%s492 + $0x8] sm:$0xff]
      %s732 = sld [smem:[#allocation3 + $0x2]]
      %s733 = sld [smem:[#allocation3 + $0x3]]
      %v734 = vstv %s732
      %v735 = vadd.f32 %v734, %v730
      %v736 = vadd.f32 %v734, %v731
      %v737 = vmul.f32 %v735, 10.0
      %v738 = vmul.f32 %v736, 10.0
      %v739 = vxor.u32 %v737, 2147483648
      %v740 = vxor.u32 %v738, 2147483648
      %v741 = vmul.f32 %v739, 1.442695
      %v742 = vpow.pop %v741
      %v743 = vmul.f32 %v740, 1.442695
      %v744 = vpow.pop %v743
      %v745 = vadd.f32 %v742, 1.0
      %v746 = vadd.f32 %v744, 1.0
      %v747 = vrcp.pop %v745
      %v748 = vmul.f32 1.0, %v747
      %v749 = vrcp.pop %v746
      %v750 = vmul.f32 1.0, %v749
      %v751 = vsub.f32 1.0, %v748
      %v752 = vsub.f32 1.0, %v750
      %v753 = vmul.f32 %v728, %v751
      %v754 = vmul.f32 %v729, %v752
      %v755 = vstv %s733
      %v756 = vmul.f32 %v753, %v755
      %v757 = vmul.f32 %v754, %v755
      %v758 = vld [vmem:[%s10] sm:$0xff]
      %v759 = vld [vmem:[%s10 + $0x8] sm:$0xff]
      %v760 = vld [vmem:[%s10 + $0x10] sm:$0xff]
      %v761 = vld [vmem:[%s10 + $0x18] sm:$0xff]
      %v762 = vld [vmem:[%s11] sm:$0x1]
      %v764 = vlaneseq
      %v765 = vshrl.u32 %v764, 7
      %v766 = vsub.s32 0, %v765
      %v767 = vrot.slane %v762, %v766
      %v770 = vsel %vm646, %v756, 0
      %v773 = vsel %vm646, %v757, 0
      %775 = vmatprep.subr.mxu0 0.0
      %776 = vmatpush1.msra.mxu0 %v758
      %777 = vmatprep.subr.mxu0 0.0
      %778 = vmatpush1.msra.mxu0 %v759
      %779 = vmatprep.subr.mxu0 0.0
      %780 = vmatpush1.msra.mxu0 %v760
      %781 = vmatprep.subr.mxu0 0.0
      %782 = vmatpush1.msra.mxu0 %v761
      %783 = vmatprep.subr.mxu0 0.0
      %784 = vmatpush1.msra.mxu0 0.0
      %785 = vmatprep.subr.mxu0 0.0
      %786 = vmatpush1.msra.mxu0 0.0
      %787 = vmatprep.subr.mxu0 0.0
      %788 = vmatpush1.msra.mxu0 0.0
      %789 = vmatprep.subr.mxu0 0.0
      %790 = vmatpush1.msra.mxu0 0.0
      %791 = vmatprep.subr.mxu0 0.0
      %792 = vmatpush1.msra.mxu0 0.0
      %793 = vmatprep.subr.mxu0 0.0
      %794 = vmatpush1.msra.mxu0 0.0
      %795 = vmatprep.subr.mxu0 0.0
      %796 = vmatpush1.msra.mxu0 0.0
      %797 = vmatprep.subr.mxu0 0.0
      %798 = vmatpush1.msra.mxu0 0.0
      %799 = vmatprep.subr.mxu0 0.0
      %800 = vmatpush1.msra.mxu0 0.0
      %801 = vmatprep.subr.mxu0 0.0
      %802 = vmatpush1.msra.mxu0 0.0
      %803 = vmatprep.subr.mxu0 0.0
      %804 = vmatpush1.msra.mxu0 0.0
      %805 = vmatprep.subr.mxu0 0.0
      %806 = vmatpush1.msra.mxu0 0.0
      %807 = vmatprep.subr.mxu0 0.0
      %808 = vmatpush1.msra.mxu0 0.0
      %809 = vmatprep.subr.mxu0 0.0
      %810 = vmatpush1.msra.mxu0 0.0
      %811 = vmatprep.subr.mxu0 0.0
      %812 = vmatpush1.msra.mxu0 0.0
      %813 = vmatprep.subr.mxu0 0.0
      %814 = vmatpush1.msra.mxu0 0.0
      %815 = vmatprep.subr.mxu0 0.0
      %816 = vmatpush1.msra.mxu0 0.0
      %817 = vmatprep.subr.mxu0 0.0
      %818 = vmatpush1.msra.mxu0 0.0
      %819 = vmatprep.subr.mxu0 0.0
      %820 = vmatpush1.msra.mxu0 0.0
      %821 = vmatprep.subr.mxu0 0.0
      %822 = vmatpush1.msra.mxu0 0.0
      %823 = vmatprep.subr.mxu0 0.0
      %824 = vmatpush1.msra.mxu0 0.0
      %825 = vmatprep.subr.mxu0 0.0
      %826 = vmatpush1.msra.mxu0 0.0
      %827 = vmatprep.subr.mxu0 0.0
      %828 = vmatpush1.msra.mxu0 0.0
      %829 = vmatprep.subr.mxu0 0.0
      %830 = vmatpush1.msra.mxu0 0.0
      %831 = vmatprep.subr.mxu0 0.0
      %832 = vmatpush1.msra.mxu0 0.0
      %833 = vmatprep.subr.mxu0 0.0
      %834 = vmatpush1.msra.mxu0 0.0
      %835 = vmatprep.subr.mxu0 0.0
      %836 = vmatpush1.msra.mxu0 0.0
      %837 = vmatprep.subr.mxu0 0.0
      %838 = vmatpush1.msra.mxu0 0.0
      %839 = vmatprep.mubr.f32.mxu0 0.0
      %840 = vmatmul.mubr.f32.gmra.mrb[0].mxu0 %v770
      %v841 = vpop.f32.mrb[0].mxu0
      %v842 = vadd.f32 %v767, %v841
      %v843 = vpop.f32.mrb[0].mxu0
      %844 = vmatprep.mubr.f32.mxu0 0.0
      %845 = vmatmul.mubr.f32.gmra.mrb[0].mxu0 %v773
      %v846 = vpop.f32.mrb[0].mxu0
      %v847 = vadd.f32 %v767, %v846
      %v848 = vpop.f32.mrb[0].mxu0
      %849 = vdwg.mxu0
      %v850 = vtanh.pop %v842
      %v851 = vtanh.pop %v847
      %v852 = vld [vmem:[%s498] sm:$0xff]
      %v853 = vld [vmem:[%s498 + $0x8] sm:$0xff]
      %s854 = sld [smem:[#allocation3 + $0x4]]
      %s855 = sld [smem:[#allocation3 + $0x5]]
      %v856 = vstv %s854
      %v857 = vadd.f32 %v856, %v852
      %v858 = vadd.f32 %v856, %v853
      %v859 = vmul.f32 %v857, 10.0
      %v860 = vmul.f32 %v858, 10.0
      %v861 = vxor.u32 %v859, 2147483648
      %v862 = vxor.u32 %v860, 2147483648
      %v863 = vmul.f32 %v861, 1.442695
      %v864 = vpow.pop %v863
      %v865 = vmul.f32 %v862, 1.442695
      %v866 = vpow.pop %v865
      %v867 = vadd.f32 %v864, 1.0
      %v868 = vadd.f32 %v866, 1.0
      %v869 = vrcp.pop %v867
      %v870 = vmul.f32 1.0, %v869
      %v871 = vrcp.pop %v868
      %v872 = vmul.f32 1.0, %v871
      %v873 = vsub.f32 1.0, %v870
      %v874 = vsub.f32 1.0, %v872
      %v875 = vmul.f32 %v850, %v873
      %v876 = vmul.f32 %v851, %v874
      %v877 = vstv %s855
      %v878 = vmul.f32 %v875, %v877
      %v879 = vmul.f32 %v876, %v877
      %v880 = vld [vmem:[%s12] sm:$0x1]
      %v881 = vlaneseq
      %v882 = vshrl.u32 %v881, 7
      %v883 = vsub.s32 0, %v882
      %v884 = vrot.slane %v880, %v883
      %v885 = vmul.f32 %v878, %v884
      %v886 = vmul.f32 %v879, %v884
      %v887 = vsel %vm646, %v885, 0.0
      %888 = vadd.xlane.f32.xlu0 %v887
      %v889 = vpop.xlane.xlu0 %888
      %v890 = vsel %vm646, %v886, 0.0
      %891 = vadd.xlane.f32.xlu0 %v890
      %v892 = vpop.xlane.xlu0 %891
      %s893 = sld [smem:[#allocation3 + $0x8]]
      %v894 = vstv %s893
      %v895 = vadd.f32 %v889, %v894
      %v896 = vadd.f32 %v892, %v894
      %v897 = vld [vmem:[%s504] sm:$0xff]
      %v898 = vld [vmem:[%s504 + $0x8] sm:$0xff]
      %s899 = sld [smem:[#allocation3 + $0x6]]
      %s900 = sld [smem:[#allocation3 + $0x7]]
      %v901 = vstv %s899
      %v902 = vadd.f32 %v901, %v897
      %v903 = vadd.f32 %v901, %v898
      %v904 = vmul.f32 %v902, 10.0
      %v905 = vmul.f32 %v903, 10.0
      %v906 = vxor.u32 %v904, 2147483648
      %v907 = vxor.u32 %v905, 2147483648
      %v908 = vmul.f32 %v906, 1.442695
      %v909 = vpow.pop %v908
      %v910 = vmul.f32 %v907, 1.442695
      %v911 = vpow.pop %v910
      %v912 = vadd.f32 %v909, 1.0
      %v913 = vadd.f32 %v911, 1.0
      %v914 = vrcp.pop %v912
      %v915 = vmul.f32 1.0, %v914
      %v916 = vrcp.pop %v913
      %v917 = vmul.f32 1.0, %v916
      %v918 = vsub.f32 1.0, %v915
      %v919 = vsub.f32 1.0, %v917
      %v920 = vmul.f32 %v850, %v918
      %v921 = vmul.f32 %v851, %v919
      %v922 = vstv %s900
      %v923 = vmul.f32 %v920, %v922
      %v924 = vmul.f32 %v921, %v922
      %v925 = vld [vmem:[%s12 + $0x1] sm:$0x1]
      %v926 = vlaneseq
      %v927 = vshrl.u32 %v926, 7
      %v928 = vsub.s32 0, %v927
      %v929 = vrot.slane %v925, %v928
      %v930 = vmul.f32 %v923, %v929
      %v931 = vmul.f32 %v924, %v929
      %v932 = vsel %vm646, %v930, 0.0
      %933 = vadd.xlane.f32.xlu0 %v932
      %v934 = vpop.xlane.xlu0 %933
      %v935 = vsel %vm646, %v931, 0.0
      %936 = vadd.xlane.f32.xlu0 %v935
      %v937 = vpop.xlane.xlu0 %936
      %s938 = sld [smem:[#allocation3 + $0x9]]
      %v939 = vstv %s938
      %v940 = vadd.f32 %v934, %v939
      %v941 = vadd.f32 %v937, %v939
      %vm942 = vcmask 7168
      %v943 = vsel %vm942, %v895, %v940
      %v944 = vsel %vm942, %v896, %v941
      %vm945 = vcmask 15360
      %946 = vst.msk [vmem:[%s510] sm:$0xff] %vm945, %v943
      %947 = vst.msk [vmem:[%s510 + $0x8] sm:$0xff] %vm945, %v944
      %s948 = smul.u32 2, %s30
      %p949 = scmp.lt.s32.totalorder %s948, 7
      %s950 = scalar_select %p949, %s948, 7
      %s951 = smul.addr %s950, 8
      %s952 = scalar_lea.vmem %s13, %s951
      // Predicated region
      $region69: #{tpu_custom_call.1} parent=67 // pred_check
        %p953 = pneg %p325
      $region70: #{tpu_custom_call.1} parent=67 // pred_check_branch
        %955 = sbr.rel (%p953) target = $region72
      $region71: #{tpu_custom_call.1} parent=67 // pred_region
        %s956 = smul.u32 2, %s30
      $region72: #{tpu_custom_call.1} parent=67 // pred_fallthru
        _
    $region68: #{tpu_custom_call.1} parent=5 // pred_fallthru
      _
    %p957 = scmp.le.s32.totalorder 2, %s25
    // Predicated region
    $region73: #{tpu_custom_call.1} parent=5 // pred_check
      %p958 = pneg %p957
    $region74: #{tpu_custom_call.1} parent=5 // pred_check_branch
      %960 = sbr.rel (%p958) target = $region76
    $region75: #{tpu_custom_call.1} parent=5 // pred_region
      %s961 = ssub.s32 %s25, 2
      // Predicated region
      $region77: #{tpu_custom_call.1} parent=75 // pred_check
        %p962 = pneg %p331
      $region78: #{tpu_custom_call.1} parent=75 // pred_check_branch
        %964 = sbr.rel (%p962) target = $region80
      $region79: #{tpu_custom_call.1} parent=75 // pred_region
        %s965 = smul.u32 2, %s31
        %p966 = scmp.lt.s32.totalorder %s965, 7
        %s967 = scalar_select %p966, %s965, 7
        %s968 = smul.addr %s967, 8
        %s969 = scalar_lea.vmem %s13, %s968
      $region80: #{tpu_custom_call.1} parent=75 // pred_fallthru
        _
    $region76: #{tpu_custom_call.1} parent=5 // pred_fallthru
      _
  $region6: #{tpu_custom_call.1} parent=0 // loop_footer
    %s29 = sadd.s32 1, %s25
  $region7: #{tpu_custom_call.1} parent=0 // loop_footer_branch
    %24 = sbr.rel target = $region3
  $region8: #{tpu_custom_call.1} parent=0 // loop_exit
    _

</llo_original>
